<compile_context>
chip_gen: v6e
topology: v6e:2x2x1
jax: 0.10.0
libtpu: 0.0.40
codegen_flags: <defaults>
</compile_context>

<pallas_src>
import functools

import numpy as np
import jax
import jax.numpy as jnp
from jax.experimental import pallas as pl
from jax.experimental.pallas import tpu as pltpu


# Fuse a same-resolution crop group into one pallas_call when its total size
# is at most this (the concat copy is negligible there, dispatch is not).
_FUSE_GROUP_BYTES = 8 * 1024 * 1024


# ---------------------------------------------------------------------------
# Pallas kernel: global-average-pool + linear projection + bias for one N-tile.
#   x_ref: (TILE_N, C, HW)   native dtype (f32 or bf16) -- cast in-kernel
#   w_ref: (C, D_pad)        f32  (zero-padded to a multiple of 128 lanes)
#   b_ref: (1, D_pad)        f32  (zero-padded)
#   o_ref: (TILE_N, D_pad)   f32
# ---------------------------------------------------------------------------
def _gap_linear_kernel(x_ref, w_ref, b_ref, o_ref, *, c, inv_hw, use_mxu):
    # Load the block in its native dtype (bf16 stays bf16 through the DMA) and
    # cast / accumulate in f32 on the VPU.
    x = x_ref[...].astype(jnp.float32)                # (TILE_N, C, HW)
    pooled = jnp.sum(x, axis=-1) * inv_hw             # (TILE_N, C)  GAP
    w = w_ref[...]                                    # (C, D_pad)
    if use_mxu:
        # Realistic channel counts (C >= 16): use the MXU.
        acc = jnp.dot(pooled, w, preferred_element_type=jnp.float32)
    else:
        # Tiny contraction (K = C < 16): unrolled broadcast-MAC on the VPU,
        # avoiding a <1%-utilized MXU op and its result-FIFO drain.
        acc = pooled[:, 0:1] * w[0:1, :]              # (TILE_N, D_pad)
        for k in range(1, c):
            acc = acc + pooled[:, k:k + 1] * w[k:k + 1, :]
    # Bias fused into the final store (saves a separate XLA pass outside).
    o_ref[...] = acc + b_ref[...]


def _pick_tile_n(n, c, hw, itemsize, budget_bytes=8 * 1024 * 1024):
    """N-tile whose *padded* VMEM footprint fits the per-buffer budget.

    The output block's sublane rule requires TILE_N % 8 == 0 or TILE_N == N.
    Preference order:
      1. n itself when n <= 8 (single full-extent block),
      2. largest multiple-of-8 divisor of n within budget whose grid length is
         even (keeps v7x's two TensorCores balanced on the "parallel" axis),
      3. largest multiple-of-8 divisor of n within budget,
      4. whole-n block if it fits the budget (grid length 1),
      5. the budget cap with a cdiv grid and a masked partial last block --
         never exceeds the budget (no full-extent VMEM-blowing fallback).
    """
    sublane = {4: 8, 2: 16, 1: 32}.get(itemsize, 8)    # sub-32-bit packs sublanes
    c_pad = -(-c // sublane) * sublane
    hw_pad = -(-hw // 128) * 128
    per_row = c_pad * hw_pad * itemsize                # padded bytes per batch row
    budget_rows = max(8, (budget_bytes // per_row) // 8 * 8)
    if n <= 8:
        return n
    best_div = None
    t = min(budget_rows, (n // 8) * 8)
    while t >= 8:
        if n % t == 0:
            if best_div is None:
                best_div = t
            if (n // t) % 2 == 0:
                return t                               # even grid length
        t -= 8
    if best_div is not None:
        return best_div
    if n * per_row <= budget_bytes:
        return n                                       # whole crop in one block
    return budget_rows                                 # cdiv grid, partial last block


def _backbone_pallas(x_nchw, w_pad, b_pad):
    """Synthetic backbone (GAP + linear + bias) for one crop batch, NCHW input."""
    n, c, h, w_sp = x_nchw.shape
    hw = h * w_sp
    d_pad = w_pad.shape[1]

    # Contiguous reshape only -- no dtype cast: the kernel DMAs the native dtype.
    x3 = x_nchw.reshape(n, c, hw)
    itemsize = jnp.dtype(x3.dtype).itemsize

    tile_n = _pick_tile_n(n, c, hw, itemsize)
    grid = (pl.cdiv(n, tile_n),)
    kernel = functools.partial(
        _gap_linear_kernel, c=c, inv_hw=1.0 / float(hw), use_mxu=(c >= 16))

    return pl.pallas_call(
        kernel,
        out_shape=jax.ShapeDtypeStruct((n, d_pad), jnp.float32),
        grid=grid,
        in_specs=[
            # (TILE_N, C, HW): trailing dims equal the full array dims, so the
            # (8, 128) rule is satisfied for any C / HW.
            pl.BlockSpec((tile_n, c, hw), lambda i: (i, 0, 0)),
            # Weight / bias: constant index_map -> fetched once, resident
            # across the N grid.
            pl.BlockSpec((c, d_pad), lambda i: (0, 0)),
            pl.BlockSpec((1, d_pad), lambda i: (0, 0)),
        ],
        out_specs=pl.BlockSpec((tile_n, d_pad), lambda i: (i, 0)),
        compiler_params=pltpu.CompilerParams(
            dimension_semantics=("parallel",),
            # Double-buffered 8 MiB input tiles exceed v5e's 16 MiB scoped
            # default; 32 MiB is still well under every chip's physical VMEM.
            vmem_limit_bytes=32 * 1024 * 1024),
    )(x3, w_pad, b_pad)


# ---------------------------------------------------------------------------
# MultiCropWrapper forward.
#
# The PyTorch module groups consecutive same-resolution crops (via
# unique_consecutive + cumsum) and concatenates each group before one backbone
# call.  For a per-sample backbone the result and ordering are identical
# crop-by-crop, so: small groups are fused into one pallas_call (dispatch
# amortization), large crops skip the full-size HBM concat and run per-crop.
# ---------------------------------------------------------------------------
def multi_crop_forward(x, weight, bias):
    if not isinstance(x, (list, tuple)):
        x = [x]

    c, d = weight.shape
    d_pad = -(-d // 128) * 128
    w_pad = jnp.pad(weight.astype(jnp.float32), ((0, 0), (0, d_pad - d)))
    b_pad = jnp.pad(bias.astype(jnp.float32), (0, d_pad - d)).reshape(1, d_pad)

    # Group consecutive crops by resolution (same semantics as the module's
    # unique_consecutive over shape[-1]).
    groups = []
    for crop in x:
        res = crop.shape[-1]
        if groups and groups[-1][0] == res:
            groups[-1][1].append(crop)
        else:
            groups.append((res, [crop]))

    feats = []
    for _, crops in groups:
        same_shape = all(cr.shape == crops[0].shape for cr in crops)
        group_bytes = sum(int(cr.size) * jnp.dtype(cr.dtype).itemsize
                          for cr in crops)
        if len(crops) > 1 and same_shape and group_bytes <= _FUSE_GROUP_BYTES:
            # Small group: one pallas_call for the whole group (the concat
            # copy is negligible; per-call dispatch/pipeline warm-up is not).
            feats.append(_backbone_pallas(jnp.concatenate(crops, axis=0),
                                          w_pad, b_pad))
        else:
            # Large crops: skip the full-size HBM concat, one call per crop.
            feats.extend(_backbone_pallas(cr, w_pad, b_pad) for cr in crops)

    out = jnp.concatenate(feats, axis=0)[:, :d]        # (sum B, D)
    return out


if __name__ == "__main__":
    # Small deterministic setup: batch=2, channels=4, feature dim=32.
    # Two "global" crops at 16x16 and two "local" crops at 8x8.
    B, C, D = 2, 4, 32
    key = jax.random.PRNGKey(0)
    k_w, k_b, k0, k1, k2, k3 = jax.random.split(key, 6)

    weight = jax.random.normal(k_w, (C, D), dtype=jnp.float32) * 0.1
    bias = jax.random.normal(k_b, (D,), dtype=jnp.float32) * 0.01

    crops = [
        jax.random.normal(k0, (B, C, 16, 16), dtype=jnp.float32),
        jax.random.normal(k1, (B, C, 16, 16), dtype=jnp.float32),
        jax.random.normal(k2, (B, C, 8, 8), dtype=jnp.float32),
        jax.random.normal(k3, (B, C, 8, 8), dtype=jnp.float32),
    ]

    # Pure-JAX reference with the original module's group-then-concat order.
    def ref_forward(crop_list):
        ref_groups = [jnp.concatenate(crop_list[0:2], axis=0),
                      jnp.concatenate(crop_list[2:4], axis=0)]
        return jnp.concatenate(
            [jnp.mean(g.astype(jnp.float32).reshape(g.shape[0], C, -1), axis=-1)
             @ weight + bias for g in ref_groups],
            axis=0)

    # f32 inputs.
    out = jax.block_until_ready(multi_crop_forward(crops, weight, bias))
    ref = ref_forward(crops)
    assert out.shape == (len(crops) * B, D), out.shape
    np.testing.assert_allclose(np.asarray(out), np.asarray(ref),
                               rtol=1e-5, atol=1e-5)

    # bf16 inputs stay bf16 through the DMA; the cast to f32 happens in-kernel.
    crops_bf16 = [cr.astype(jnp.bfloat16) for cr in crops]
    out_bf16 = jax.block_until_ready(multi_crop_forward(crops_bf16, weight, bias))
    ref_bf16 = ref_forward(crops_bf16)
    np.testing.assert_allclose(np.asarray(out_bf16), np.asarray(ref_bf16),
                               rtol=1e-5, atol=1e-5)

    print("KERNEL_OK")
</pallas_src>

<mosaic_0001>
module attributes {stable_mosaic.version = 11 : i64} {
  func.func @_gap_linear_kernel(%arg0: i32, %arg1: memref<4x4x256xf32, #tpu.memory_space<vmem>>, %arg2: memref<4x128xf32, #tpu.memory_space<vmem>>, %arg3: memref<1x128xf32, #tpu.memory_space<vmem>>, %arg4: memref<4x128xf32, #tpu.memory_space<vmem>>) attributes {dimension_semantics = [#tpu.dimension_semantics<parallel>], iteration_bounds = array<i64: 1>, scalar_prefetch = 0 : i64, scratch_operands = 0 : i64, tpu.core_type = #tpu.core_type<tc>, window_params = [{transform_indices = @transform_0, window_bounds = array<i64: 4, 4, 256>}, {pipeline_mode = #tpu.pipeline_mode<synchronous>, transform_indices = @transform_1, window_bounds = array<i64: 4, 128>}, {pipeline_mode = #tpu.pipeline_mode<synchronous>, transform_indices = @transform_2, window_bounds = array<i64: 1, 128>}, {transform_indices = @transform_3, window_bounds = array<i64: 4, 128>}]} {
    %c0 = arith.constant 0 : index
    %c0_0 = arith.constant 0 : index
    %c0_1 = arith.constant 0 : index
    %0 = vector.load %arg1[%c0, %c0_0, %c0_1] : memref<4x4x256xf32, #tpu.memory_space<vmem>>, vector<4x4x256xf32>
    %cst = arith.constant dense<0.000000e+00> : vector<4x4xf32>
    %1 = vector.multi_reduction <add>, %0, %cst [2] : vector<4x4x256xf32> to vector<4x4xf32>
    %cst_2 = arith.constant 3.906250e-03 : f32
    %2 = vector.broadcast %cst_2 : f32 to vector<4x4xf32>
    %3 = arith.mulf %1, %2 : vector<4x4xf32>
    %c0_3 = arith.constant 0 : index
    %c0_4 = arith.constant 0 : index
    %4 = vector.load %arg2[%c0_3, %c0_4] : memref<4x128xf32, #tpu.memory_space<vmem>>, vector<4x128xf32>
    %5 = vector.extract_strided_slice %3 {offsets = [0, 0], sizes = [4, 1], strides = [1, 1]} : vector<4x4xf32> to vector<4x1xf32>
    %6 = vector.extract_strided_slice %4 {offsets = [0, 0], sizes = [1, 128], strides = [1, 1]} : vector<4x128xf32> to vector<1x128xf32>
    %7 = vector.broadcast %5 : vector<4x1xf32> to vector<4x128xf32>
    %8 = vector.broadcast %6 : vector<1x128xf32> to vector<4x128xf32>
    %9 = arith.mulf %7, %8 : vector<4x128xf32>
    %10 = vector.extract_strided_slice %3 {offsets = [0, 1], sizes = [4, 1], strides = [1, 1]} : vector<4x4xf32> to vector<4x1xf32>
    %11 = vector.extract_strided_slice %4 {offsets = [1, 0], sizes = [1, 128], strides = [1, 1]} : vector<4x128xf32> to vector<1x128xf32>
    %12 = vector.broadcast %10 : vector<4x1xf32> to vector<4x128xf32>
    %13 = vector.broadcast %11 : vector<1x128xf32> to vector<4x128xf32>
    %14 = arith.mulf %12, %13 : vector<4x128xf32>
    %15 = arith.addf %9, %14 : vector<4x128xf32>
    %16 = vector.extract_strided_slice %3 {offsets = [0, 2], sizes = [4, 1], strides = [1, 1]} : vector<4x4xf32> to vector<4x1xf32>
    %17 = vector.extract_strided_slice %4 {offsets = [2, 0], sizes = [1, 128], strides = [1, 1]} : vector<4x128xf32> to vector<1x128xf32>
    %18 = vector.broadcast %16 : vector<4x1xf32> to vector<4x128xf32>
    %19 = vector.broadcast %17 : vector<1x128xf32> to vector<4x128xf32>
    %20 = arith.mulf %18, %19 : vector<4x128xf32>
    %21 = arith.addf %15, %20 : vector<4x128xf32>
    %22 = vector.extract_strided_slice %3 {offsets = [0, 3], sizes = [4, 1], strides = [1, 1]} : vector<4x4xf32> to vector<4x1xf32>
    %23 = vector.extract_strided_slice %4 {offsets = [3, 0], sizes = [1, 128], strides = [1, 1]} : vector<4x128xf32> to vector<1x128xf32>
    %24 = vector.broadcast %22 : vector<4x1xf32> to vector<4x128xf32>
    %25 = vector.broadcast %23 : vector<1x128xf32> to vector<4x128xf32>
    %26 = arith.mulf %24, %25 : vector<4x128xf32>
    %27 = arith.addf %21, %26 : vector<4x128xf32>
    %c0_5 = arith.constant 0 : index
    %c0_6 = arith.constant 0 : index
    %28 = vector.load %arg3[%c0_5, %c0_6] : memref<1x128xf32, #tpu.memory_space<vmem>>, vector<1x128xf32>
    %29 = vector.broadcast %28 : vector<1x128xf32> to vector<4x128xf32>
    %30 = arith.addf %27, %29 : vector<4x128xf32>
    %c0_7 = arith.constant 0 : index
    %c0_8 = arith.constant 0 : index
    %31 = vector.load %arg4[%c0_7, %c0_8] : memref<4x128xf32, #tpu.memory_space<vmem>>, vector<4x128xf32>
    tpu.vector_store %arg4[%c0_7, %c0_8], %30 {strides = array<i32>} : memref<4x128xf32, #tpu.memory_space<vmem>>, vector<4x128xf32>,
    return
  }
  func.func @transform_0(%arg0: i32) -> (i32, i32, i32) {
    %c0_i32 = arith.constant 0 : i32
    %c0_i32_0 = arith.constant 0 : i32
    %c0_i32_1 = arith.constant 0 : i32
    return %arg0, %c0_i32, %c0_i32_0 : i32, i32, i32
  }
  func.func @transform_1(%arg0: i32) -> (i32, i32) {
    %c0_i32 = arith.constant 0 : i32
    %c0_i32_0 = arith.constant 0 : i32
    %c0_i32_1 = arith.constant 0 : i32
    return %c0_i32, %c0_i32_0 : i32, i32
  }
  func.func @transform_2(%arg0: i32) -> (i32, i32) {
    %c0_i32 = arith.constant 0 : i32
    %c0_i32_0 = arith.constant 0 : i32
    %c0_i32_1 = arith.constant 0 : i32
    return %c0_i32, %c0_i32_0 : i32, i32
  }
  func.func @transform_3(%arg0: i32) -> (i32, i32) {
    %c0_i32 = arith.constant 0 : i32
    %c0_i32_0 = arith.constant 0 : i32
    return %arg0, %c0_i32 : i32, i32
  }
}

</mosaic_0001>

<llo_original>
// kernel: tpu_custom_call.1
$region0: #{tpu_custom_call.1}
  #allocation0 [shape = 'u32[]', space=smem, size = 0x4, offset = 0x4, fixed_abs, tag = 'smem constant byte address 0x4 - core index']
  #allocation1 [shape = 'u32[144,128]{1,0:T(1,128)}', space=vmem, size = 0x12000, scoped, tag = 'internal scratch']
  %s0 = inlined_call_operand.hbm [shape: f32[4,4,256], index: 0, kind: input, shape index: {}]
  %s1 = inlined_call_operand.hbm [shape: f32[4,128], index: 1, kind: input, shape index: {}]
  %s2 = inlined_call_operand.vmem [shape: f32[1,128], index: 2, kind: input, shape index: {}]
  %s3 = inlined_call_operand.hbm [shape: f32[4,128], index: 3, kind: output, shape index: {}]
  %s4 = sld [smem:[#allocation0]]
  $region30: #{tpu_custom_call.1} parent=0
    _
  %s6 = ssub.s32 1, %s4
  %s7 = scalar_select 0, %s6, %s4
  $region1: #{tpu_custom_call.1} parent=0
    #allocation2 [shape = 'u8[16384]{0}', space=vmem, size = 0x4000, scoped, tag = 'input window, operand 0, single buffered']
    #allocation3 [shape = 's32[1]{0}', space=sflag, size = 0x4, scoped, tag = 'scoped memory for tpu_custom_call.1']
    #allocation4 [shape = 's32[1]{0}', space=sflag, size = 0x4, scoped, tag = 'scoped memory for tpu_custom_call.1']
    #allocation5 [shape = 'u8[2048]{0}', space=vmem, size = 0x800, scoped, tag = 'input window, operand 1, single buffered']
    #allocation6 [shape = 's32[1]{0}', space=sflag, size = 0x4, scoped, tag = 'scoped memory for tpu_custom_call.1']
    #allocation7 [shape = 'u8[2048]{0}', space=vmem, size = 0x800, scoped, tag = 'output window, operand 0, single buffered']
    %8 = vsyncpa [#allocation3], 0
    %9 = vsyncpa [#allocation6], 0
    %10 = vsyncpa [#allocation4], 0
    // Predicated region
    $region2: #{tpu_custom_call.1} parent=1 // pred_check
      _
    $region3: #{tpu_custom_call.1} parent=1 // pred_check_branch
      %12 = sbr.rel (0) target = $region5
    $region4: #{tpu_custom_call.1} parent=1 // pred_region
      %s14 = ssub.s32 512, 512
      %15 = vsyncadd [#allocation3], %s14
      %s16 = sshll.u32 [#allocation2], 4
      %s17 = int_to_ptr.vmem [resolvable:$true] %s16
      %22 = dma.hbm_to_vmem [thread:$0]  %s0, 512, %s17, [#allocation3], 128, 128, 8
    $region5: #{tpu_custom_call.1} parent=1 // pred_fallthru
      _
    // Predicated region
    $region6: #{tpu_custom_call.1} parent=1 // pred_check
      _
    $region7: #{tpu_custom_call.1} parent=1 // pred_check_branch
      %24 = sbr.rel (0) target = $region9
    $region8: #{tpu_custom_call.1} parent=1 // pred_region
      %s26 = ssub.s32 64, 64
      %27 = vsyncadd [#allocation6], %s26
      %s29 = sshll.u32 [#allocation5], 4
      %s30 = int_to_ptr.vmem [resolvable:$true] %s29
      %32 = dma.hbm_to_vmem [thread:$0]  %s1, 64, %s30, [#allocation6]
    $region9: #{tpu_custom_call.1} parent=1 // pred_fallthru
      _
    // Predicated region
    $region10: #{tpu_custom_call.1} parent=1 // pred_check
      _
    $region11: #{tpu_custom_call.1} parent=1 // pred_check_branch
      %34 = sbr.rel (0) target = $region13
    $region12: #{tpu_custom_call.1} parent=1 // pred_region
      _
    $region13: #{tpu_custom_call.1} parent=1 // pred_fallthru
      _
    // Predicated region
    $region14: #{tpu_custom_call.1} parent=1 // pred_check
      _
    $region15: #{tpu_custom_call.1} parent=1 // pred_check_branch
      %36 = sbr.rel (0) target = $region17
    $region16: #{tpu_custom_call.1} parent=1 // pred_region
      %37 = dma.done [#allocation3], 512
    $region17: #{tpu_custom_call.1} parent=1 // pred_fallthru
      _
    // Predicated region
    $region18: #{tpu_custom_call.1} parent=1 // pred_check
      _
    $region19: #{tpu_custom_call.1} parent=1 // pred_check_branch
      %39 = sbr.rel (0) target = $region21
    $region20: #{tpu_custom_call.1} parent=1 // pred_region
      %40 = dma.done [#allocation6], 64
    $region21: #{tpu_custom_call.1} parent=1 // pred_fallthru
      _
    %v41 = vld [vmem:[#allocation2] sm:$0xff]
    %v42 = vld [vmem:[#allocation2 + $0x8] sm:$0xff]
    %v43 = vld [vmem:[#allocation2 + $0x10] sm:$0xff]
    %v44 = vld [vmem:[#allocation2 + $0x18] sm:$0xff]
    %v49 = vcombine.high %v41, %v41
    %v50 = vcombine.high %v42, %v42
    %v51 = vcombine.high %v43, %v43
    %v52 = vcombine.high %v44, %v44
    %vm57 = vcmask 1043456
    %v58 = vsel %vm57, %v41, 0.0
    %v59 = vsel %vm57, %v49, 0.0
    %v60 = vadd.f32 %v58, %v59
    %61 = vadd.xlane.f32.xlu0 %v60
    %v62 = vpop.xlane.xlu0 %61
    %v63 = vsel %vm57, %v42, 0.0
    %v64 = vsel %vm57, %v50, 0.0
    %v65 = vadd.f32 %v63, %v64
    %66 = vadd.xlane.f32.xlu0 %v65
    %v67 = vpop.xlane.xlu0 %66
    %v68 = vsel %vm57, %v43, 0.0
    %v69 = vsel %vm57, %v51, 0.0
    %v70 = vadd.f32 %v68, %v69
    %71 = vadd.xlane.f32.xlu0 %v70
    %v72 = vpop.xlane.xlu0 %71
    %v73 = vsel %vm57, %v44, 0.0
    %v74 = vsel %vm57, %v52, 0.0
    %v75 = vadd.f32 %v73, %v74
    %76 = vadd.xlane.f32.xlu0 %v75
    %v77 = vpop.xlane.xlu0 %76
    %v78 = vmul.f32 %v62, 0.00390625
    %v79 = vmul.f32 %v67, 0.00390625
    %v80 = vmul.f32 %v72, 0.00390625
    %v81 = vmul.f32 %v77, 0.00390625
    %v82 = vld [vmem:[#allocation5] sm:$0xf]
    %v83 = vlaneseq
    %v84 = vshrl.u32 %v83, 7
    %v85 = vsub.s32 0, %v84
    %v86 = vrot.slane %v78, %v85
    %v87 = vlaneseq
    %v88 = vshrl.u32 %v87, 7
    %v89 = vsub.s32 0, %v88
    %v90 = vrot.slane %v79, %v89
    %v91 = vlaneseq
    %v92 = vshrl.u32 %v91, 7
    %v93 = vsub.s32 0, %v92
    %v94 = vrot.slane %v80, %v93
    %v95 = vlaneseq
    %v96 = vshrl.u32 %v95, 7
    %v97 = vsub.s32 0, %v96
    %v98 = vrot.slane %v81, %v97
    %v99 = vlaneseq
    %v100 = vshrl.u32 %v99, 7
    %v101 = vsub.s32 0, %v100
    %v102 = vrot.slane %v82, %v101
    %105 = vbcast.lane.b32.xlu0 %v102, 256
    %v106 = vpop.permute.xlu0 %105
    %s108 = sor.u32 256, 8
    %109 = vbcast.lane.b32.xlu0 %v102, %s108
    %v110 = vpop.permute.xlu0 %109
    %s112 = sor.u32 256, 16
    %113 = vbcast.lane.b32.xlu0 %v102, %s112
    %v114 = vpop.permute.xlu0 %113
    %s116 = sor.u32 256, 24
    %117 = vbcast.lane.b32.xlu0 %v102, %s116
    %v118 = vpop.permute.xlu0 %117
    %s120 = sor.u32 256, 32
    %121 = vbcast.lane.b32.xlu0 %v102, %s120
    %v122 = vpop.permute.xlu0 %121
    %s124 = sor.u32 256, 40
    %125 = vbcast.lane.b32.xlu0 %v102, %s124
    %v126 = vpop.permute.xlu0 %125
    %s128 = sor.u32 256, 48
    %129 = vbcast.lane.b32.xlu0 %v102, %s128
    %v130 = vpop.permute.xlu0 %129
    %s132 = sor.u32 256, 56
    %133 = vbcast.lane.b32.xlu0 %v102, %s132
    %v134 = vpop.permute.xlu0 %133
    %s136 = sor.u32 256, 64
    %137 = vbcast.lane.b32.xlu0 %v102, %s136
    %v138 = vpop.permute.xlu0 %137
    %s140 = sor.u32 256, 72
    %141 = vbcast.lane.b32.xlu0 %v102, %s140
    %v142 = vpop.permute.xlu0 %141
    %s144 = sor.u32 256, 80
    %145 = vbcast.lane.b32.xlu0 %v102, %s144
    %v146 = vpop.permute.xlu0 %145
    %s148 = sor.u32 256, 88
    %149 = vbcast.lane.b32.xlu0 %v102, %s148
    %v150 = vpop.permute.xlu0 %149
    %s152 = sor.u32 256, 96
    %153 = vbcast.lane.b32.xlu0 %v102, %s152
    %v154 = vpop.permute.xlu0 %153
    %s156 = sor.u32 256, 104
    %157 = vbcast.lane.b32.xlu0 %v102, %s156
    %v158 = vpop.permute.xlu0 %157
    %s160 = sor.u32 256, 112
    %161 = vbcast.lane.b32.xlu0 %v102, %s160
    %v162 = vpop.permute.xlu0 %161
    %s164 = sor.u32 256, 120
    %165 = vbcast.lane.b32.xlu0 %v102, %s164
    %v166 = vpop.permute.xlu0 %165
    %v183 = vmul.f32 %v86, %v106
    %v184 = vmul.f32 %v86, %v110
    %v185 = vmul.f32 %v86, %v114
    %v186 = vmul.f32 %v86, %v118
    %v187 = vmul.f32 %v86, %v122
    %v188 = vmul.f32 %v86, %v126
    %v189 = vmul.f32 %v86, %v130
    %v190 = vmul.f32 %v86, %v134
    %v191 = vmul.f32 %v86, %v138
    %v192 = vmul.f32 %v86, %v142
    %v193 = vmul.f32 %v86, %v146
    %v194 = vmul.f32 %v86, %v150
    %v195 = vmul.f32 %v86, %v154
    %v196 = vmul.f32 %v86, %v158
    %v197 = vmul.f32 %v86, %v162
    %v198 = vmul.f32 %v86, %v166
    %v199 = vmul.f32 %v90, %v106
    %v200 = vmul.f32 %v90, %v110
    %v201 = vmul.f32 %v90, %v114
    %v202 = vmul.f32 %v90, %v118
    %v203 = vmul.f32 %v90, %v122
    %v204 = vmul.f32 %v90, %v126
    %v205 = vmul.f32 %v90, %v130
    %v206 = vmul.f32 %v90, %v134
    %v207 = vmul.f32 %v90, %v138
    %v208 = vmul.f32 %v90, %v142
    %v209 = vmul.f32 %v90, %v146
    %v210 = vmul.f32 %v90, %v150
    %v211 = vmul.f32 %v90, %v154
    %v212 = vmul.f32 %v90, %v158
    %v213 = vmul.f32 %v90, %v162
    %v214 = vmul.f32 %v90, %v166
    %v215 = vmul.f32 %v94, %v106
    %v216 = vmul.f32 %v94, %v110
    %v217 = vmul.f32 %v94, %v114
    %v218 = vmul.f32 %v94, %v118
    %v219 = vmul.f32 %v94, %v122
    %v220 = vmul.f32 %v94, %v126
    %v221 = vmul.f32 %v94, %v130
    %v222 = vmul.f32 %v94, %v134
    %v223 = vmul.f32 %v94, %v138
    %v224 = vmul.f32 %v94, %v142
    %v225 = vmul.f32 %v94, %v146
    %v226 = vmul.f32 %v94, %v150
    %v227 = vmul.f32 %v94, %v154
    %v228 = vmul.f32 %v94, %v158
    %v229 = vmul.f32 %v94, %v162
    %v230 = vmul.f32 %v94, %v166
    %v231 = vmul.f32 %v98, %v106
    %v232 = vmul.f32 %v98, %v110
    %v233 = vmul.f32 %v98, %v114
    %v234 = vmul.f32 %v98, %v118
    %v235 = vmul.f32 %v98, %v122
    %v236 = vmul.f32 %v98, %v126
    %v237 = vmul.f32 %v98, %v130
    %v238 = vmul.f32 %v98, %v134
    %v239 = vmul.f32 %v98, %v138
    %v240 = vmul.f32 %v98, %v142
    %v241 = vmul.f32 %v98, %v146
    %v242 = vmul.f32 %v98, %v150
    %v243 = vmul.f32 %v98, %v154
    %v244 = vmul.f32 %v98, %v158
    %v245 = vmul.f32 %v98, %v162
    %v246 = vmul.f32 %v98, %v166
    %v247 = vlaneseq
    %v248 = vshrl.u32 %v247, 7
    %v249 = vsub.s32 1, %v248
    %v250 = vrot.slane %v78, %v249
    %v251 = vlaneseq
    %v252 = vshrl.u32 %v251, 7
    %v253 = vsub.s32 1, %v252
    %v254 = vrot.slane %v79, %v253
    %v255 = vlaneseq
    %v256 = vshrl.u32 %v255, 7
    %v257 = vsub.s32 1, %v256
    %v258 = vrot.slane %v80, %v257
    %v259 = vlaneseq
    %v260 = vshrl.u32 %v259, 7
    %v261 = vsub.s32 1, %v260
    %v262 = vrot.slane %v81, %v261
    %v263 = vlaneseq
    %v264 = vshrl.u32 %v263, 7
    %v265 = vsub.s32 1, %v264
    %v266 = vrot.slane %v82, %v265
    %269 = vbcast.lane.b32.xlu0 %v266, 256
    %v270 = vpop.permute.xlu0 %269
    %s272 = sor.u32 256, 8
    %273 = vbcast.lane.b32.xlu0 %v266, %s272
    %v274 = vpop.permute.xlu0 %273
    %s276 = sor.u32 256, 16
    %277 = vbcast.lane.b32.xlu0 %v266, %s276
    %v278 = vpop.permute.xlu0 %277
    %s280 = sor.u32 256, 24
    %281 = vbcast.lane.b32.xlu0 %v266, %s280
    %v282 = vpop.permute.xlu0 %281
    %s284 = sor.u32 256, 32
    %285 = vbcast.lane.b32.xlu0 %v266, %s284
    %v286 = vpop.permute.xlu0 %285
    %s288 = sor.u32 256, 40
    %289 = vbcast.lane.b32.xlu0 %v266, %s288
    %v290 = vpop.permute.xlu0 %289
    %s292 = sor.u32 256, 48
    %293 = vbcast.lane.b32.xlu0 %v266, %s292
    %v294 = vpop.permute.xlu0 %293
    %s296 = sor.u32 256, 56
    %297 = vbcast.lane.b32.xlu0 %v266, %s296
    %v298 = vpop.permute.xlu0 %297
    %s300 = sor.u32 256, 64
    %301 = vbcast.lane.b32.xlu0 %v266, %s300
    %v302 = vpop.permute.xlu0 %301
    %s304 = sor.u32 256, 72
    %305 = vbcast.lane.b32.xlu0 %v266, %s304
    %v306 = vpop.permute.xlu0 %305
    %s308 = sor.u32 256, 80
    %309 = vbcast.lane.b32.xlu0 %v266, %s308
    %v310 = vpop.permute.xlu0 %309
    %s312 = sor.u32 256, 88
    %313 = vbcast.lane.b32.xlu0 %v266, %s312
    %v314 = vpop.permute.xlu0 %313
    %s316 = sor.u32 256, 96
    %317 = vbcast.lane.b32.xlu0 %v266, %s316
    %v318 = vpop.permute.xlu0 %317
    %s320 = sor.u32 256, 104
    %321 = vbcast.lane.b32.xlu0 %v266, %s320
    %v322 = vpop.permute.xlu0 %321
    %s324 = sor.u32 256, 112
    %325 = vbcast.lane.b32.xlu0 %v266, %s324
    %v326 = vpop.permute.xlu0 %325
    %s328 = sor.u32 256, 120
    %329 = vbcast.lane.b32.xlu0 %v266, %s328
    %v330 = vpop.permute.xlu0 %329
    %v347 = vmul.f32 %v250, %v270
    %v348 = vmul.f32 %v250, %v274
    %v349 = vmul.f32 %v250, %v278
    %v350 = vmul.f32 %v250, %v282
    %v351 = vmul.f32 %v250, %v286
    %v352 = vmul.f32 %v250, %v290
    %v353 = vmul.f32 %v250, %v294
    %v354 = vmul.f32 %v250, %v298
    %v355 = vmul.f32 %v250, %v302
    %v356 = vmul.f32 %v250, %v306
    %v357 = vmul.f32 %v250, %v310
    %v358 = vmul.f32 %v250, %v314
    %v359 = vmul.f32 %v250, %v318
    %v360 = vmul.f32 %v250, %v322
    %v361 = vmul.f32 %v250, %v326
    %v362 = vmul.f32 %v250, %v330
    %v363 = vmul.f32 %v254, %v270
    %v364 = vmul.f32 %v254, %v274
    %v365 = vmul.f32 %v254, %v278
    %v366 = vmul.f32 %v254, %v282
    %v367 = vmul.f32 %v254, %v286
    %v368 = vmul.f32 %v254, %v290
    %v369 = vmul.f32 %v254, %v294
    %v370 = vmul.f32 %v254, %v298
    %v371 = vmul.f32 %v254, %v302
    %v372 = vmul.f32 %v254, %v306
    %v373 = vmul.f32 %v254, %v310
    %v374 = vmul.f32 %v254, %v314
    %v375 = vmul.f32 %v254, %v318
    %v376 = vmul.f32 %v254, %v322
    %v377 = vmul.f32 %v254, %v326
    %v378 = vmul.f32 %v254, %v330
    %v379 = vmul.f32 %v258, %v270
    %v380 = vmul.f32 %v258, %v274
    %v381 = vmul.f32 %v258, %v278
    %v382 = vmul.f32 %v258, %v282
    %v383 = vmul.f32 %v258, %v286
    %v384 = vmul.f32 %v258, %v290
    %v385 = vmul.f32 %v258, %v294
    %v386 = vmul.f32 %v258, %v298
    %v387 = vmul.f32 %v258, %v302
    %v388 = vmul.f32 %v258, %v306
    %v389 = vmul.f32 %v258, %v310
    %v390 = vmul.f32 %v258, %v314
    %v391 = vmul.f32 %v258, %v318
    %v392 = vmul.f32 %v258, %v322
    %v393 = vmul.f32 %v258, %v326
    %v394 = vmul.f32 %v258, %v330
    %v395 = vmul.f32 %v262, %v270
    %v396 = vmul.f32 %v262, %v274
    %v397 = vmul.f32 %v262, %v278
    %v398 = vmul.f32 %v262, %v282
    %v399 = vmul.f32 %v262, %v286
    %v400 = vmul.f32 %v262, %v290
    %v401 = vmul.f32 %v262, %v294
    %v402 = vmul.f32 %v262, %v298
    %v403 = vmul.f32 %v262, %v302
    %v404 = vmul.f32 %v262, %v306
    %v405 = vmul.f32 %v262, %v310
    %v406 = vmul.f32 %v262, %v314
    %v407 = vmul.f32 %v262, %v318
    %v408 = vmul.f32 %v262, %v322
    %v409 = vmul.f32 %v262, %v326
    %v410 = vmul.f32 %v262, %v330
    %v411 = vadd.f32 %v183, %v347
    %v412 = vadd.f32 %v184, %v348
    %v413 = vadd.f32 %v185, %v349
    %v414 = vadd.f32 %v186, %v350
    %v415 = vadd.f32 %v187, %v351
    %v416 = vadd.f32 %v188, %v352
    %v417 = vadd.f32 %v189, %v353
    %v418 = vadd.f32 %v190, %v354
    %v419 = vadd.f32 %v191, %v355
    %v420 = vadd.f32 %v192, %v356
    %v421 = vadd.f32 %v193, %v357
    %v422 = vadd.f32 %v194, %v358
    %v423 = vadd.f32 %v195, %v359
    %v424 = vadd.f32 %v196, %v360
    %v425 = vadd.f32 %v197, %v361
    %v426 = vadd.f32 %v198, %v362
    %v427 = vadd.f32 %v199, %v363
    %v428 = vadd.f32 %v200, %v364
    %v429 = vadd.f32 %v201, %v365
    %v430 = vadd.f32 %v202, %v366
    %v431 = vadd.f32 %v203, %v367
    %v432 = vadd.f32 %v204, %v368
    %v433 = vadd.f32 %v205, %v369
    %v434 = vadd.f32 %v206, %v370
    %v435 = vadd.f32 %v207, %v371
    %v436 = vadd.f32 %v208, %v372
    %v437 = vadd.f32 %v209, %v373
    %v438 = vadd.f32 %v210, %v374
    %v439 = vadd.f32 %v211, %v375
    %v440 = vadd.f32 %v212, %v376
    %v441 = vadd.f32 %v213, %v377
    %v442 = vadd.f32 %v214, %v378
    %v443 = vadd.f32 %v215, %v379
    %v444 = vadd.f32 %v216, %v380
    %v445 = vadd.f32 %v217, %v381
    %v446 = vadd.f32 %v218, %v382
    %v447 = vadd.f32 %v219, %v383
    %v448 = vadd.f32 %v220, %v384
    %v449 = vadd.f32 %v221, %v385
    %v450 = vadd.f32 %v222, %v386
    %v451 = vadd.f32 %v223, %v387
    %v452 = vadd.f32 %v224, %v388
    %v453 = vadd.f32 %v225, %v389
    %v454 = vadd.f32 %v226, %v390
    %v455 = vadd.f32 %v227, %v391
    %v456 = vadd.f32 %v228, %v392
    %v457 = vadd.f32 %v229, %v393
    %v458 = vadd.f32 %v230, %v394
    %v459 = vadd.f32 %v231, %v395
    %v460 = vadd.f32 %v232, %v396
    %v461 = vadd.f32 %v233, %v397
    %v462 = vadd.f32 %v234, %v398
    %v463 = vadd.f32 %v235, %v399
    %v464 = vadd.f32 %v236, %v400
    %v465 = vadd.f32 %v237, %v401
    %v466 = vadd.f32 %v238, %v402
    %v467 = vadd.f32 %v239, %v403
    %v468 = vadd.f32 %v240, %v404
    %v469 = vadd.f32 %v241, %v405
    %v470 = vadd.f32 %v242, %v406
    %v471 = vadd.f32 %v243, %v407
    %v472 = vadd.f32 %v244, %v408
    %v473 = vadd.f32 %v245, %v409
    %v474 = vadd.f32 %v246, %v410
    %v475 = vlaneseq
    %v476 = vshrl.u32 %v475, 7
    %v477 = vsub.s32 2, %v476
    %v478 = vrot.slane %v78, %v477
    %v479 = vlaneseq
    %v480 = vshrl.u32 %v479, 7
    %v481 = vsub.s32 2, %v480
    %v482 = vrot.slane %v79, %v481
    %v483 = vlaneseq
    %v484 = vshrl.u32 %v483, 7
    %v485 = vsub.s32 2, %v484
    %v486 = vrot.slane %v80, %v485
    %v487 = vlaneseq
    %v488 = vshrl.u32 %v487, 7
    %v489 = vsub.s32 2, %v488
    %v490 = vrot.slane %v81, %v489
    %v491 = vlaneseq
    %v492 = vshrl.u32 %v491, 7
    %v493 = vsub.s32 2, %v492
    %v494 = vrot.slane %v82, %v493
    %497 = vbcast.lane.b32.xlu0 %v494, 256
    %v498 = vpop.permute.xlu0 %497
    %s500 = sor.u32 256, 8
    %501 = vbcast.lane.b32.xlu0 %v494, %s500
    %v502 = vpop.permute.xlu0 %501
    %s504 = sor.u32 256, 16
    %505 = vbcast.lane.b32.xlu0 %v494, %s504
    %v506 = vpop.permute.xlu0 %505
    %s508 = sor.u32 256, 24
    %509 = vbcast.lane.b32.xlu0 %v494, %s508
    %v510 = vpop.permute.xlu0 %509
    %s512 = sor.u32 256, 32
    %513 = vbcast.lane.b32.xlu0 %v494, %s512
    %v514 = vpop.permute.xlu0 %513
    %s516 = sor.u32 256, 40
    %517 = vbcast.lane.b32.xlu0 %v494, %s516
    %v518 = vpop.permute.xlu0 %517
    %s520 = sor.u32 256, 48
    %521 = vbcast.lane.b32.xlu0 %v494, %s520
    %v522 = vpop.permute.xlu0 %521
    %s524 = sor.u32 256, 56
    %525 = vbcast.lane.b32.xlu0 %v494, %s524
    %v526 = vpop.permute.xlu0 %525
    %s528 = sor.u32 256, 64
    %529 = vbcast.lane.b32.xlu0 %v494, %s528
    %v530 = vpop.permute.xlu0 %529
    %s532 = sor.u32 256, 72
    %533 = vbcast.lane.b32.xlu0 %v494, %s532
    %v534 = vpop.permute.xlu0 %533
    %s536 = sor.u32 256, 80
    %537 = vbcast.lane.b32.xlu0 %v494, %s536
    %v538 = vpop.permute.xlu0 %537
    %s540 = sor.u32 256, 88
    %541 = vbcast.lane.b32.xlu0 %v494, %s540
    %v542 = vpop.permute.xlu0 %541
    %s544 = sor.u32 256, 96
    %545 = vbcast.lane.b32.xlu0 %v494, %s544
    %v546 = vpop.permute.xlu0 %545
    %s548 = sor.u32 256, 104
    %549 = vbcast.lane.b32.xlu0 %v494, %s548
    %v550 = vpop.permute.xlu0 %549
    %s552 = sor.u32 256, 112
    %553 = vbcast.lane.b32.xlu0 %v494, %s552
    %v554 = vpop.permute.xlu0 %553
    %s556 = sor.u32 256, 120
    %557 = vbcast.lane.b32.xlu0 %v494, %s556
    %v558 = vpop.permute.xlu0 %557
    %v575 = vmul.f32 %v478, %v498
    %v576 = vmul.f32 %v478, %v502
    %v577 = vmul.f32 %v478, %v506
    %v578 = vmul.f32 %v478, %v510
    %v579 = vmul.f32 %v478, %v514
    %v580 = vmul.f32 %v478, %v518
    %v581 = vmul.f32 %v478, %v522
    %v582 = vmul.f32 %v478, %v526
    %v583 = vmul.f32 %v478, %v530
    %v584 = vmul.f32 %v478, %v534
    %v585 = vmul.f32 %v478, %v538
    %v586 = vmul.f32 %v478, %v542
    %v587 = vmul.f32 %v478, %v546
    %v588 = vmul.f32 %v478, %v550
    %v589 = vmul.f32 %v478, %v554
    %v590 = vmul.f32 %v478, %v558
    %v591 = vmul.f32 %v482, %v498
    %v592 = vmul.f32 %v482, %v502
    %v593 = vmul.f32 %v482, %v506
    %v594 = vmul.f32 %v482, %v510
    %v595 = vmul.f32 %v482, %v514
    %v596 = vmul.f32 %v482, %v518
    %v597 = vmul.f32 %v482, %v522
    %v598 = vmul.f32 %v482, %v526
    %v599 = vmul.f32 %v482, %v530
    %v600 = vmul.f32 %v482, %v534
    %v601 = vmul.f32 %v482, %v538
    %v602 = vmul.f32 %v482, %v542
    %v603 = vmul.f32 %v482, %v546
    %v604 = vmul.f32 %v482, %v550
    %v605 = vmul.f32 %v482, %v554
    %v606 = vmul.f32 %v482, %v558
    %v607 = vmul.f32 %v486, %v498
    %v608 = vmul.f32 %v486, %v502
    %v609 = vmul.f32 %v486, %v506
    %v610 = vmul.f32 %v486, %v510
    %v611 = vmul.f32 %v486, %v514
    %v612 = vmul.f32 %v486, %v518
    %v613 = vmul.f32 %v486, %v522
    %v614 = vmul.f32 %v486, %v526
    %v615 = vmul.f32 %v486, %v530
    %v616 = vmul.f32 %v486, %v534
    %v617 = vmul.f32 %v486, %v538
    %v618 = vmul.f32 %v486, %v542
    %v619 = vmul.f32 %v486, %v546
    %v620 = vmul.f32 %v486, %v550
    %v621 = vmul.f32 %v486, %v554
    %v622 = vmul.f32 %v486, %v558
    %v623 = vmul.f32 %v490, %v498
    %v624 = vmul.f32 %v490, %v502
    %v625 = vmul.f32 %v490, %v506
    %v626 = vmul.f32 %v490, %v510
    %v627 = vmul.f32 %v490, %v514
    %v628 = vmul.f32 %v490, %v518
    %v629 = vmul.f32 %v490, %v522
    %v630 = vmul.f32 %v490, %v526
    %v631 = vmul.f32 %v490, %v530
    %v632 = vmul.f32 %v490, %v534
    %v633 = vmul.f32 %v490, %v538
    %v634 = vmul.f32 %v490, %v542
    %v635 = vmul.f32 %v490, %v546
    %v636 = vmul.f32 %v490, %v550
    %v637 = vmul.f32 %v490, %v554
    %v638 = vmul.f32 %v490, %v558
    %v639 = vadd.f32 %v411, %v575
    %v640 = vadd.f32 %v412, %v576
    %v641 = vadd.f32 %v413, %v577
    %v642 = vadd.f32 %v414, %v578
    %v643 = vadd.f32 %v415, %v579
    %v644 = vadd.f32 %v416, %v580
    %v645 = vadd.f32 %v417, %v581
    %v646 = vadd.f32 %v418, %v582
    %v647 = vadd.f32 %v419, %v583
    %v648 = vadd.f32 %v420, %v584
    %v649 = vadd.f32 %v421, %v585
    %v650 = vadd.f32 %v422, %v586
    %v651 = vadd.f32 %v423, %v587
    %v652 = vadd.f32 %v424, %v588
    %v653 = vadd.f32 %v425, %v589
    %v654 = vadd.f32 %v426, %v590
    %v655 = vadd.f32 %v427, %v591
    %v656 = vadd.f32 %v428, %v592
    %v657 = vadd.f32 %v429, %v593
    %v658 = vadd.f32 %v430, %v594
    %v659 = vadd.f32 %v431, %v595
    %v660 = vadd.f32 %v432, %v596
    %v661 = vadd.f32 %v433, %v597
    %v662 = vadd.f32 %v434, %v598
    %v663 = vadd.f32 %v435, %v599
    %v664 = vadd.f32 %v436, %v600
    %v665 = vadd.f32 %v437, %v601
    %v666 = vadd.f32 %v438, %v602
    %v667 = vadd.f32 %v439, %v603
    %v668 = vadd.f32 %v440, %v604
    %v669 = vadd.f32 %v441, %v605
    %v670 = vadd.f32 %v442, %v606
    %v671 = vadd.f32 %v443, %v607
    %v672 = vadd.f32 %v444, %v608
    %v673 = vadd.f32 %v445, %v609
    %v674 = vadd.f32 %v446, %v610
    %v675 = vadd.f32 %v447, %v611
    %v676 = vadd.f32 %v448, %v612
    %v677 = vadd.f32 %v449, %v613
    %v678 = vadd.f32 %v450, %v614
    %v679 = vadd.f32 %v451, %v615
    %v680 = vadd.f32 %v452, %v616
    %v681 = vadd.f32 %v453, %v617
    %v682 = vadd.f32 %v454, %v618
    %v683 = vadd.f32 %v455, %v619
    %v684 = vadd.f32 %v456, %v620
    %v685 = vadd.f32 %v457, %v621
    %v686 = vadd.f32 %v458, %v622
    %v687 = vadd.f32 %v459, %v623
    %v688 = vadd.f32 %v460, %v624
    %v689 = vadd.f32 %v461, %v625
    %v690 = vadd.f32 %v462, %v626
    %v691 = vadd.f32 %v463, %v627
    %v692 = vadd.f32 %v464, %v628
    %v693 = vadd.f32 %v465, %v629
    %v694 = vadd.f32 %v466, %v630
    %v695 = vadd.f32 %v467, %v631
    %v696 = vadd.f32 %v468, %v632
    %v697 = vadd.f32 %v469, %v633
    %v698 = vadd.f32 %v470, %v634
    %v699 = vadd.f32 %v471, %v635
    %v700 = vadd.f32 %v472, %v636
    %v701 = vadd.f32 %v473, %v637
    %v702 = vadd.f32 %v474, %v638
    %v703 = vlaneseq
    %v704 = vshrl.u32 %v703, 7
    %v705 = vsub.s32 3, %v704
    %v706 = vrot.slane %v78, %v705
    %v707 = vlaneseq
    %v708 = vshrl.u32 %v707, 7
    %v709 = vsub.s32 3, %v708
    %v710 = vrot.slane %v79, %v709
    %v711 = vlaneseq
    %v712 = vshrl.u32 %v711, 7
    %v713 = vsub.s32 3, %v712
    %v714 = vrot.slane %v80, %v713
    %v715 = vlaneseq
    %v716 = vshrl.u32 %v715, 7
    %v717 = vsub.s32 3, %v716
    %v718 = vrot.slane %v81, %v717
    %v719 = vlaneseq
    %v720 = vshrl.u32 %v719, 7
    %v721 = vsub.s32 3, %v720
    %v722 = vrot.slane %v82, %v721
    %725 = vbcast.lane.b32.xlu0 %v722, 256
    %v726 = vpop.permute.xlu0 %725
    %s728 = sor.u32 256, 8
    %729 = vbcast.lane.b32.xlu0 %v722, %s728
    %v730 = vpop.permute.xlu0 %729
    %s732 = sor.u32 256, 16
    %733 = vbcast.lane.b32.xlu0 %v722, %s732
    %v734 = vpop.permute.xlu0 %733
    %s736 = sor.u32 256, 24
    %737 = vbcast.lane.b32.xlu0 %v722, %s736
    %v738 = vpop.permute.xlu0 %737
    %s740 = sor.u32 256, 32
    %741 = vbcast.lane.b32.xlu0 %v722, %s740
    %v742 = vpop.permute.xlu0 %741
    %s744 = sor.u32 256, 40
    %745 = vbcast.lane.b32.xlu0 %v722, %s744
    %v746 = vpop.permute.xlu0 %745
    %s748 = sor.u32 256, 48
    %749 = vbcast.lane.b32.xlu0 %v722, %s748
    %v750 = vpop.permute.xlu0 %749
    %s752 = sor.u32 256, 56
    %753 = vbcast.lane.b32.xlu0 %v722, %s752
    %v754 = vpop.permute.xlu0 %753
    %s756 = sor.u32 256, 64
    %757 = vbcast.lane.b32.xlu0 %v722, %s756
    %v758 = vpop.permute.xlu0 %757
    %s760 = sor.u32 256, 72
    %761 = vbcast.lane.b32.xlu0 %v722, %s760
    %v762 = vpop.permute.xlu0 %761
    %s764 = sor.u32 256, 80
    %765 = vbcast.lane.b32.xlu0 %v722, %s764
    %v766 = vpop.permute.xlu0 %765
    %s768 = sor.u32 256, 88
    %769 = vbcast.lane.b32.xlu0 %v722, %s768
    %v770 = vpop.permute.xlu0 %769
    %s772 = sor.u32 256, 96
    %773 = vbcast.lane.b32.xlu0 %v722, %s772
    %v774 = vpop.permute.xlu0 %773
    %s776 = sor.u32 256, 104
    %777 = vbcast.lane.b32.xlu0 %v722, %s776
    %v778 = vpop.permute.xlu0 %777
    %s780 = sor.u32 256, 112
    %781 = vbcast.lane.b32.xlu0 %v722, %s780
    %v782 = vpop.permute.xlu0 %781
    %s784 = sor.u32 256, 120
    %785 = vbcast.lane.b32.xlu0 %v722, %s784
    %v786 = vpop.permute.xlu0 %785
    %v803 = vmul.f32 %v706, %v726
    %v804 = vmul.f32 %v706, %v730
    %v805 = vmul.f32 %v706, %v734
    %v806 = vmul.f32 %v706, %v738
    %v807 = vmul.f32 %v706, %v742
    %v808 = vmul.f32 %v706, %v746
    %v809 = vmul.f32 %v706, %v750
    %v810 = vmul.f32 %v706, %v754
    %v811 = vmul.f32 %v706, %v758
    %v812 = vmul.f32 %v706, %v762
    %v813 = vmul.f32 %v706, %v766
    %v814 = vmul.f32 %v706, %v770
    %v815 = vmul.f32 %v706, %v774
    %v816 = vmul.f32 %v706, %v778
    %v817 = vmul.f32 %v706, %v782
    %v818 = vmul.f32 %v706, %v786
    %v819 = vmul.f32 %v710, %v726
    %v820 = vmul.f32 %v710, %v730
    %v821 = vmul.f32 %v710, %v734
    %v822 = vmul.f32 %v710, %v738
    %v823 = vmul.f32 %v710, %v742
    %v824 = vmul.f32 %v710, %v746
    %v825 = vmul.f32 %v710, %v750
    %v826 = vmul.f32 %v710, %v754
    %v827 = vmul.f32 %v710, %v758
    %v828 = vmul.f32 %v710, %v762
    %v829 = vmul.f32 %v710, %v766
    %v830 = vmul.f32 %v710, %v770
    %v831 = vmul.f32 %v710, %v774
    %v832 = vmul.f32 %v710, %v778
    %v833 = vmul.f32 %v710, %v782
    %v834 = vmul.f32 %v710, %v786
    %v835 = vmul.f32 %v714, %v726
    %v836 = vmul.f32 %v714, %v730
    %v837 = vmul.f32 %v714, %v734
    %v838 = vmul.f32 %v714, %v738
    %v839 = vmul.f32 %v714, %v742
    %v840 = vmul.f32 %v714, %v746
    %v841 = vmul.f32 %v714, %v750
    %v842 = vmul.f32 %v714, %v754
    %v843 = vmul.f32 %v714, %v758
    %v844 = vmul.f32 %v714, %v762
    %v845 = vmul.f32 %v714, %v766
    %v846 = vmul.f32 %v714, %v770
    %v847 = vmul.f32 %v714, %v774
    %v848 = vmul.f32 %v714, %v778
    %v849 = vmul.f32 %v714, %v782
    %v850 = vmul.f32 %v714, %v786
    %v851 = vmul.f32 %v718, %v726
    %v852 = vmul.f32 %v718, %v730
    %v853 = vmul.f32 %v718, %v734
    %v854 = vmul.f32 %v718, %v738
    %v855 = vmul.f32 %v718, %v742
    %v856 = vmul.f32 %v718, %v746
    %v857 = vmul.f32 %v718, %v750
    %v858 = vmul.f32 %v718, %v754
    %v859 = vmul.f32 %v718, %v758
    %v860 = vmul.f32 %v718, %v762
    %v861 = vmul.f32 %v718, %v766
    %v862 = vmul.f32 %v718, %v770
    %v863 = vmul.f32 %v718, %v774
    %v864 = vmul.f32 %v718, %v778
    %v865 = vmul.f32 %v718, %v782
    %v866 = vmul.f32 %v718, %v786
    %v867 = vadd.f32 %v639, %v803
    %v868 = vadd.f32 %v640, %v804
    %v869 = vadd.f32 %v641, %v805
    %v870 = vadd.f32 %v642, %v806
    %v871 = vadd.f32 %v643, %v807
    %v872 = vadd.f32 %v644, %v808
    %v873 = vadd.f32 %v645, %v809
    %v874 = vadd.f32 %v646, %v810
    %v875 = vadd.f32 %v647, %v811
    %v876 = vadd.f32 %v648, %v812
    %v877 = vadd.f32 %v649, %v813
    %v878 = vadd.f32 %v650, %v814
    %v879 = vadd.f32 %v651, %v815
    %v880 = vadd.f32 %v652, %v816
    %v881 = vadd.f32 %v653, %v817
    %v882 = vadd.f32 %v654, %v818
    %v883 = vadd.f32 %v655, %v819
    %v884 = vadd.f32 %v656, %v820
    %v885 = vadd.f32 %v657, %v821
    %v886 = vadd.f32 %v658, %v822
    %v887 = vadd.f32 %v659, %v823
    %v888 = vadd.f32 %v660, %v824
    %v889 = vadd.f32 %v661, %v825
    %v890 = vadd.f32 %v662, %v826
    %v891 = vadd.f32 %v663, %v827
    %v892 = vadd.f32 %v664, %v828
    %v893 = vadd.f32 %v665, %v829
    %v894 = vadd.f32 %v666, %v830
    %v895 = vadd.f32 %v667, %v831
    %v896 = vadd.f32 %v668, %v832
    %v897 = vadd.f32 %v669, %v833
    %v898 = vadd.f32 %v670, %v834
    %v899 = vadd.f32 %v671, %v835
    %v900 = vadd.f32 %v672, %v836
    %v901 = vadd.f32 %v673, %v837
    %v902 = vadd.f32 %v674, %v838
    %v903 = vadd.f32 %v675, %v839
    %v904 = vadd.f32 %v676, %v840
    %v905 = vadd.f32 %v677, %v841
    %v906 = vadd.f32 %v678, %v842
    %v907 = vadd.f32 %v679, %v843
    %v908 = vadd.f32 %v680, %v844
    %v909 = vadd.f32 %v681, %v845
    %v910 = vadd.f32 %v682, %v846
    %v911 = vadd.f32 %v683, %v847
    %v912 = vadd.f32 %v684, %v848
    %v913 = vadd.f32 %v685, %v849
    %v914 = vadd.f32 %v686, %v850
    %v915 = vadd.f32 %v687, %v851
    %v916 = vadd.f32 %v688, %v852
    %v917 = vadd.f32 %v689, %v853
    %v918 = vadd.f32 %v690, %v854
    %v919 = vadd.f32 %v691, %v855
    %v920 = vadd.f32 %v692, %v856
    %v921 = vadd.f32 %v693, %v857
    %v922 = vadd.f32 %v694, %v858
    %v923 = vadd.f32 %v695, %v859
    %v924 = vadd.f32 %v696, %v860
    %v925 = vadd.f32 %v697, %v861
    %v926 = vadd.f32 %v698, %v862
    %v927 = vadd.f32 %v699, %v863
    %v928 = vadd.f32 %v700, %v864
    %v929 = vadd.f32 %v701, %v865
    %v930 = vadd.f32 %v702, %v866
    %v931 = vld [vmem:[%s2] sm:$0x1]
    %v933 = vlaneseq
    %v934 = vshrl.u32 %v933, 7
    %v935 = vsub.s32 0, %v934
    %v936 = vrot.slane %v931, %v935
    %938 = vbcast.lane.b32.xlu0 %v936, 256
    %v939 = vpop.permute.xlu0 %938
    %s941 = sor.u32 256, 8
    %942 = vbcast.lane.b32.xlu0 %v936, %s941
    %v943 = vpop.permute.xlu0 %942
    %s945 = sor.u32 256, 16
    %946 = vbcast.lane.b32.xlu0 %v936, %s945
    %v947 = vpop.permute.xlu0 %946
    %s949 = sor.u32 256, 24
    %950 = vbcast.lane.b32.xlu0 %v936, %s949
    %v951 = vpop.permute.xlu0 %950
    %s953 = sor.u32 256, 32
    %954 = vbcast.lane.b32.xlu0 %v936, %s953
    %v955 = vpop.permute.xlu0 %954
    %s957 = sor.u32 256, 40
    %958 = vbcast.lane.b32.xlu0 %v936, %s957
    %v959 = vpop.permute.xlu0 %958
    %s961 = sor.u32 256, 48
    %962 = vbcast.lane.b32.xlu0 %v936, %s961
    %v963 = vpop.permute.xlu0 %962
    %s965 = sor.u32 256, 56
    %966 = vbcast.lane.b32.xlu0 %v936, %s965
    %v967 = vpop.permute.xlu0 %966
    %s969 = sor.u32 256, 64
    %970 = vbcast.lane.b32.xlu0 %v936, %s969
    %v971 = vpop.permute.xlu0 %970
    %s973 = sor.u32 256, 72
    %974 = vbcast.lane.b32.xlu0 %v936, %s973
    %v975 = vpop.permute.xlu0 %974
    %s977 = sor.u32 256, 80
    %978 = vbcast.lane.b32.xlu0 %v936, %s977
    %v979 = vpop.permute.xlu0 %978
    %s981 = sor.u32 256, 88
    %982 = vbcast.lane.b32.xlu0 %v936, %s981
    %v983 = vpop.permute.xlu0 %982
    %s985 = sor.u32 256, 96
    %986 = vbcast.lane.b32.xlu0 %v936, %s985
    %v987 = vpop.permute.xlu0 %986
    %s989 = sor.u32 256, 104
    %990 = vbcast.lane.b32.xlu0 %v936, %s989
    %v991 = vpop.permute.xlu0 %990
    %s993 = sor.u32 256, 112
    %994 = vbcast.lane.b32.xlu0 %v936, %s993
    %v995 = vpop.permute.xlu0 %994
    %s997 = sor.u32 256, 120
    %998 = vbcast.lane.b32.xlu0 %v936, %s997
    %v999 = vpop.permute.xlu0 %998
    %v1016 = vadd.f32 %v867, %v939
    %v1017 = vadd.f32 %v868, %v943
    %v1018 = vadd.f32 %v869, %v947
    %v1019 = vadd.f32 %v870, %v951
    %v1020 = vadd.f32 %v871, %v955
    %v1021 = vadd.f32 %v872, %v959
    %v1022 = vadd.f32 %v873, %v963
    %v1023 = vadd.f32 %v874, %v967
    %v1024 = vadd.f32 %v875, %v971
    %v1025 = vadd.f32 %v876, %v975
    %v1026 = vadd.f32 %v877, %v979
    %v1027 = vadd.f32 %v878, %v983
    %v1028 = vadd.f32 %v879, %v987
    %v1029 = vadd.f32 %v880, %v991
    %v1030 = vadd.f32 %v881, %v995
    %v1031 = vadd.f32 %v882, %v999
    %v1032 = vadd.f32 %v883, %v939
    %v1033 = vadd.f32 %v884, %v943
    %v1034 = vadd.f32 %v885, %v947
    %v1035 = vadd.f32 %v886, %v951
    %v1036 = vadd.f32 %v887, %v955
    %v1037 = vadd.f32 %v888, %v959
    %v1038 = vadd.f32 %v889, %v963
    %v1039 = vadd.f32 %v890, %v967
    %v1040 = vadd.f32 %v891, %v971
    %v1041 = vadd.f32 %v892, %v975
    %v1042 = vadd.f32 %v893, %v979
    %v1043 = vadd.f32 %v894, %v983
    %v1044 = vadd.f32 %v895, %v987
    %v1045 = vadd.f32 %v896, %v991
    %v1046 = vadd.f32 %v897, %v995
    %v1047 = vadd.f32 %v898, %v999
    %v1048 = vadd.f32 %v899, %v939
    %v1049 = vadd.f32 %v900, %v943
    %v1050 = vadd.f32 %v901, %v947
    %v1051 = vadd.f32 %v902, %v951
    %v1052 = vadd.f32 %v903, %v955
    %v1053 = vadd.f32 %v904, %v959
    %v1054 = vadd.f32 %v905, %v963
    %v1055 = vadd.f32 %v906, %v967
    %v1056 = vadd.f32 %v907, %v971
    %v1057 = vadd.f32 %v908, %v975
    %v1058 = vadd.f32 %v909, %v979
    %v1059 = vadd.f32 %v910, %v983
    %v1060 = vadd.f32 %v911, %v987
    %v1061 = vadd.f32 %v912, %v991
    %v1062 = vadd.f32 %v913, %v995
    %v1063 = vadd.f32 %v914, %v999
    %v1064 = vadd.f32 %v915, %v939
    %v1065 = vadd.f32 %v916, %v943
    %v1066 = vadd.f32 %v917, %v947
    %v1067 = vadd.f32 %v918, %v951
    %v1068 = vadd.f32 %v919, %v955
    %v1069 = vadd.f32 %v920, %v959
    %v1070 = vadd.f32 %v921, %v963
    %v1071 = vadd.f32 %v922, %v967
    %v1072 = vadd.f32 %v923, %v971
    %v1073 = vadd.f32 %v924, %v975
    %v1074 = vadd.f32 %v925, %v979
    %v1075 = vadd.f32 %v926, %v983
    %v1076 = vadd.f32 %v927, %v987
    %v1077 = vadd.f32 %v928, %v991
    %v1078 = vadd.f32 %v929, %v995
    %v1079 = vadd.f32 %v930, %v999
    %1144 = vset.pattern.permute.xlu0 0
    %1145 = vperm.xlu0 %1144, %v1016
    %v1146 = vpop.permute.xlu0 %1145
    %1147 = vset.pattern.permute.xlu0 0
    %1148 = vperm.xlu0 %1147, %v1017
    %v1149 = vpop.permute.xlu0 %1148
    %1150 = vset.pattern.permute.xlu0 0
    %1151 = vperm.xlu0 %1150, %v1018
    %v1152 = vpop.permute.xlu0 %1151
    %1153 = vset.pattern.permute.xlu0 0
    %1154 = vperm.xlu0 %1153, %v1019
    %v1155 = vpop.permute.xlu0 %1154
    %1156 = vset.pattern.permute.xlu0 0
    %1157 = vperm.xlu0 %1156, %v1020
    %v1158 = vpop.permute.xlu0 %1157
    %1159 = vset.pattern.permute.xlu0 0
    %1160 = vperm.xlu0 %1159, %v1021
    %v1161 = vpop.permute.xlu0 %1160
    %1162 = vset.pattern.permute.xlu0 0
    %1163 = vperm.xlu0 %1162, %v1022
    %v1164 = vpop.permute.xlu0 %1163
    %1165 = vset.pattern.permute.xlu0 0
    %1166 = vperm.xlu0 %1165, %v1023
    %v1167 = vpop.permute.xlu0 %1166
    %1168 = vset.pattern.permute.xlu0 0
    %1169 = vperm.xlu0 %1168, %v1024
    %v1170 = vpop.permute.xlu0 %1169
    %1171 = vset.pattern.permute.xlu0 0
    %1172 = vperm.xlu0 %1171, %v1025
    %v1173 = vpop.permute.xlu0 %1172
    %1174 = vset.pattern.permute.xlu0 0
    %1175 = vperm.xlu0 %1174, %v1026
    %v1176 = vpop.permute.xlu0 %1175
    %1177 = vset.pattern.permute.xlu0 0
    %1178 = vperm.xlu0 %1177, %v1027
    %v1179 = vpop.permute.xlu0 %1178
    %1180 = vset.pattern.permute.xlu0 0
    %1181 = vperm.xlu0 %1180, %v1028
    %v1182 = vpop.permute.xlu0 %1181
    %1183 = vset.pattern.permute.xlu0 0
    %1184 = vperm.xlu0 %1183, %v1029
    %v1185 = vpop.permute.xlu0 %1184
    %1186 = vset.pattern.permute.xlu0 0
    %1187 = vperm.xlu0 %1186, %v1030
    %v1188 = vpop.permute.xlu0 %1187
    %1189 = vset.pattern.permute.xlu0 0
    %1190 = vperm.xlu0 %1189, %v1031
    %v1191 = vpop.permute.xlu0 %1190
    %1192 = vset.pattern.permute.xlu0 0
    %1193 = vperm.xlu0 %1192, %v1032
    %v1194 = vpop.permute.xlu0 %1193
    %1195 = vset.pattern.permute.xlu0 0
    %1196 = vperm.xlu0 %1195, %v1033
    %v1197 = vpop.permute.xlu0 %1196
    %1198 = vset.pattern.permute.xlu0 0
    %1199 = vperm.xlu0 %1198, %v1034
    %v1200 = vpop.permute.xlu0 %1199
    %1201 = vset.pattern.permute.xlu0 0
    %1202 = vperm.xlu0 %1201, %v1035
    %v1203 = vpop.permute.xlu0 %1202
    %1204 = vset.pattern.permute.xlu0 0
    %1205 = vperm.xlu0 %1204, %v1036
    %v1206 = vpop.permute.xlu0 %1205
    %1207 = vset.pattern.permute.xlu0 0
    %1208 = vperm.xlu0 %1207, %v1037
    %v1209 = vpop.permute.xlu0 %1208
    %1210 = vset.pattern.permute.xlu0 0
    %1211 = vperm.xlu0 %1210, %v1038
    %v1212 = vpop.permute.xlu0 %1211
    %1213 = vset.pattern.permute.xlu0 0
    %1214 = vperm.xlu0 %1213, %v1039
    %v1215 = vpop.permute.xlu0 %1214
    %1216 = vset.pattern.permute.xlu0 0
    %1217 = vperm.xlu0 %1216, %v1040
    %v1218 = vpop.permute.xlu0 %1217
    %1219 = vset.pattern.permute.xlu0 0
    %1220 = vperm.xlu0 %1219, %v1041
    %v1221 = vpop.permute.xlu0 %1220
    %1222 = vset.pattern.permute.xlu0 0
    %1223 = vperm.xlu0 %1222, %v1042
    %v1224 = vpop.permute.xlu0 %1223
    %1225 = vset.pattern.permute.xlu0 0
    %1226 = vperm.xlu0 %1225, %v1043
    %v1227 = vpop.permute.xlu0 %1226
    %1228 = vset.pattern.permute.xlu0 0
    %1229 = vperm.xlu0 %1228, %v1044
    %v1230 = vpop.permute.xlu0 %1229
    %1231 = vset.pattern.permute.xlu0 0
    %1232 = vperm.xlu0 %1231, %v1045
    %v1233 = vpop.permute.xlu0 %1232
    %1234 = vset.pattern.permute.xlu0 0
    %1235 = vperm.xlu0 %1234, %v1046
    %v1236 = vpop.permute.xlu0 %1235
    %1237 = vset.pattern.permute.xlu0 0
    %1238 = vperm.xlu0 %1237, %v1047
    %v1239 = vpop.permute.xlu0 %1238
    %1240 = vset.pattern.permute.xlu0 0
    %1241 = vperm.xlu0 %1240, %v1048
    %v1242 = vpop.permute.xlu0 %1241
    %1243 = vset.pattern.permute.xlu0 0
    %1244 = vperm.xlu0 %1243, %v1049
    %v1245 = vpop.permute.xlu0 %1244
    %1246 = vset.pattern.permute.xlu0 0
    %1247 = vperm.xlu0 %1246, %v1050
    %v1248 = vpop.permute.xlu0 %1247
    %1249 = vset.pattern.permute.xlu0 0
    %1250 = vperm.xlu0 %1249, %v1051
    %v1251 = vpop.permute.xlu0 %1250
    %1252 = vset.pattern.permute.xlu0 0
    %1253 = vperm.xlu0 %1252, %v1052
    %v1254 = vpop.permute.xlu0 %1253
    %1255 = vset.pattern.permute.xlu0 0
    %1256 = vperm.xlu0 %1255, %v1053
    %v1257 = vpop.permute.xlu0 %1256
    %1258 = vset.pattern.permute.xlu0 0
    %1259 = vperm.xlu0 %1258, %v1054
    %v1260 = vpop.permute.xlu0 %1259
    %1261 = vset.pattern.permute.xlu0 0
    %1262 = vperm.xlu0 %1261, %v1055
    %v1263 = vpop.permute.xlu0 %1262
    %1264 = vset.pattern.permute.xlu0 0
    %1265 = vperm.xlu0 %1264, %v1056
    %v1266 = vpop.permute.xlu0 %1265
    %1267 = vset.pattern.permute.xlu0 0
    %1268 = vperm.xlu0 %1267, %v1057
    %v1269 = vpop.permute.xlu0 %1268
    %1270 = vset.pattern.permute.xlu0 0
    %1271 = vperm.xlu0 %1270, %v1058
    %v1272 = vpop.permute.xlu0 %1271
    %1273 = vset.pattern.permute.xlu0 0
    %1274 = vperm.xlu0 %1273, %v1059
    %v1275 = vpop.permute.xlu0 %1274
    %1276 = vset.pattern.permute.xlu0 0
    %1277 = vperm.xlu0 %1276, %v1060
    %v1278 = vpop.permute.xlu0 %1277
    %1279 = vset.pattern.permute.xlu0 0
    %1280 = vperm.xlu0 %1279, %v1061
    %v1281 = vpop.permute.xlu0 %1280
    %1282 = vset.pattern.permute.xlu0 0
    %1283 = vperm.xlu0 %1282, %v1062
    %v1284 = vpop.permute.xlu0 %1283
    %1285 = vset.pattern.permute.xlu0 0
    %1286 = vperm.xlu0 %1285, %v1063
    %v1287 = vpop.permute.xlu0 %1286
    %1288 = vset.pattern.permute.xlu0 0
    %1289 = vperm.xlu0 %1288, %v1064
    %v1290 = vpop.permute.xlu0 %1289
    %1291 = vset.pattern.permute.xlu0 0
    %1292 = vperm.xlu0 %1291, %v1065
    %v1293 = vpop.permute.xlu0 %1292
    %1294 = vset.pattern.permute.xlu0 0
    %1295 = vperm.xlu0 %1294, %v1066
    %v1296 = vpop.permute.xlu0 %1295
    %1297 = vset.pattern.permute.xlu0 0
    %1298 = vperm.xlu0 %1297, %v1067
    %v1299 = vpop.permute.xlu0 %1298
    %1300 = vset.pattern.permute.xlu0 0
    %1301 = vperm.xlu0 %1300, %v1068
    %v1302 = vpop.permute.xlu0 %1301
    %1303 = vset.pattern.permute.xlu0 0
    %1304 = vperm.xlu0 %1303, %v1069
    %v1305 = vpop.permute.xlu0 %1304
    %1306 = vset.pattern.permute.xlu0 0
    %1307 = vperm.xlu0 %1306, %v1070
    %v1308 = vpop.permute.xlu0 %1307
    %1309 = vset.pattern.permute.xlu0 0
    %1310 = vperm.xlu0 %1309, %v1071
    %v1311 = vpop.permute.xlu0 %1310
    %1312 = vset.pattern.permute.xlu0 0
    %1313 = vperm.xlu0 %1312, %v1072
    %v1314 = vpop.permute.xlu0 %1313
    %1315 = vset.pattern.permute.xlu0 0
    %1316 = vperm.xlu0 %1315, %v1073
    %v1317 = vpop.permute.xlu0 %1316
    %1318 = vset.pattern.permute.xlu0 0
    %1319 = vperm.xlu0 %1318, %v1074
    %v1320 = vpop.permute.xlu0 %1319
    %1321 = vset.pattern.permute.xlu0 0
    %1322 = vperm.xlu0 %1321, %v1075
    %v1323 = vpop.permute.xlu0 %1322
    %1324 = vset.pattern.permute.xlu0 0
    %1325 = vperm.xlu0 %1324, %v1076
    %v1326 = vpop.permute.xlu0 %1325
    %1327 = vset.pattern.permute.xlu0 0
    %1328 = vperm.xlu0 %1327, %v1077
    %v1329 = vpop.permute.xlu0 %1328
    %1330 = vset.pattern.permute.xlu0 0
    %1331 = vperm.xlu0 %1330, %v1078
    %v1332 = vpop.permute.xlu0 %1331
    %1333 = vset.pattern.permute.xlu0 0
    %1334 = vperm.xlu0 %1333, %v1079
    %v1335 = vpop.permute.xlu0 %1334
    %v1336 = vlaneseq
    %v1337 = vand.u32 %v1336, 127
    %v1338 = vlaneseq
    %v1339 = vshrl.u32 %v1338, 7
    %v1340 = vsub.s32 %v1337, %v1339
    %v1341 = vrot.slane %v1146, %v1340
    %v1342 = vadd.s32 %v1337, 4294967288
    %v1343 = vlaneseq
    %v1344 = vshrl.u32 %v1343, 7
    %v1345 = vsub.s32 %v1342, %v1344
    %v1346 = vrot.slane %v1149, %v1345
    %vm1347 = vcmask 130112
    %v1348 = vsel %vm1347, %v1346, %v1341
    %v1349 = vadd.s32 %v1337, 4294967280
    %v1350 = vlaneseq
    %v1351 = vshrl.u32 %v1350, 7
    %v1352 = vsub.s32 %v1349, %v1351
    %v1353 = vrot.slane %v1152, %v1352
    %vm1354 = vcmask 195712
    %v1355 = vsel %vm1354, %v1353, %v1348
    %v1356 = vadd.s32 %v1337, 4294967272
    %v1357 = vlaneseq
    %v1358 = vshrl.u32 %v1357, 7
    %v1359 = vsub.s32 %v1356, %v1358
    %v1360 = vrot.slane %v1155, %v1359
    %vm1361 = vcmask 261312
    %v1362 = vsel %vm1361, %v1360, %v1355
    %v1363 = vadd.s32 %v1337, 4294967264
    %v1364 = vlaneseq
    %v1365 = vshrl.u32 %v1364, 7
    %v1366 = vsub.s32 %v1363, %v1365
    %v1367 = vrot.slane %v1158, %v1366
    %vm1368 = vcmask 326912
    %v1369 = vsel %vm1368, %v1367, %v1362
    %v1370 = vadd.s32 %v1337, 4294967256
    %v1371 = vlaneseq
    %v1372 = vshrl.u32 %v1371, 7
    %v1373 = vsub.s32 %v1370, %v1372
    %v1374 = vrot.slane %v1161, %v1373
    %vm1375 = vcmask 392512
    %v1376 = vsel %vm1375, %v1374, %v1369
    %v1377 = vadd.s32 %v1337, 4294967248
    %v1378 = vlaneseq
    %v1379 = vshrl.u32 %v1378, 7
    %v1380 = vsub.s32 %v1377, %v1379
    %v1381 = vrot.slane %v1164, %v1380
    %vm1382 = vcmask 458112
    %v1383 = vsel %vm1382, %v1381, %v1376
    %v1384 = vadd.s32 %v1337, 4294967240
    %v1385 = vlaneseq
    %v1386 = vshrl.u32 %v1385, 7
    %v1387 = vsub.s32 %v1384, %v1386
    %v1388 = vrot.slane %v1167, %v1387
    %vm1389 = vcmask 523712
    %v1390 = vsel %vm1389, %v1388, %v1383
    %v1391 = vadd.s32 %v1337, 4294967232
    %v1392 = vlaneseq
    %v1393 = vshrl.u32 %v1392, 7
    %v1394 = vsub.s32 %v1391, %v1393
    %v1395 = vrot.slane %v1170, %v1394
    %vm1396 = vcmask 589312
    %v1397 = vsel %vm1396, %v1395, %v1390
    %v1398 = vadd.s32 %v1337, 4294967224
    %v1399 = vlaneseq
    %v1400 = vshrl.u32 %v1399, 7
    %v1401 = vsub.s32 %v1398, %v1400
    %v1402 = vrot.slane %v1173, %v1401
    %vm1403 = vcmask 654912
    %v1404 = vsel %vm1403, %v1402, %v1397
    %v1405 = vadd.s32 %v1337, 4294967216
    %v1406 = vlaneseq
    %v1407 = vshrl.u32 %v1406, 7
    %v1408 = vsub.s32 %v1405, %v1407
    %v1409 = vrot.slane %v1176, %v1408
    %vm1410 = vcmask 720512
    %v1411 = vsel %vm1410, %v1409, %v1404
    %v1412 = vadd.s32 %v1337, 4294967208
    %v1413 = vlaneseq
    %v1414 = vshrl.u32 %v1413, 7
    %v1415 = vsub.s32 %v1412, %v1414
    %v1416 = vrot.slane %v1179, %v1415
    %vm1417 = vcmask 786112
    %v1418 = vsel %vm1417, %v1416, %v1411
    %v1419 = vadd.s32 %v1337, 4294967200
    %v1420 = vlaneseq
    %v1421 = vshrl.u32 %v1420, 7
    %v1422 = vsub.s32 %v1419, %v1421
    %v1423 = vrot.slane %v1182, %v1422
    %vm1424 = vcmask 851712
    %v1425 = vsel %vm1424, %v1423, %v1418
    %v1426 = vadd.s32 %v1337, 4294967192
    %v1427 = vlaneseq
    %v1428 = vshrl.u32 %v1427, 7
    %v1429 = vsub.s32 %v1426, %v1428
    %v1430 = vrot.slane %v1185, %v1429
    %vm1431 = vcmask 917312
    %v1432 = vsel %vm1431, %v1430, %v1425
    %v1433 = vadd.s32 %v1337, 4294967184
    %v1434 = vlaneseq
    %v1435 = vshrl.u32 %v1434, 7
    %v1436 = vsub.s32 %v1433, %v1435
    %v1437 = vrot.slane %v1188, %v1436
    %vm1438 = vcmask 982912
    %v1439 = vsel %vm1438, %v1437, %v1432
    %v1440 = vadd.s32 %v1337, 4294967176
    %v1441 = vlaneseq
    %v1442 = vshrl.u32 %v1441, 7
    %v1443 = vsub.s32 %v1440, %v1442
    %v1444 = vrot.slane %v1191, %v1443
    %vm1445 = vcmask 1048512
    %v1446 = vsel %vm1445, %v1444, %v1439
    %v1447 = vlaneseq
    %v1448 = vshrl.u32 %v1447, 7
    %v1449 = vsub.s32 %v1337, %v1448
    %v1450 = vrot.slane %v1194, %v1449
    %v1451 = vlaneseq
    %v1452 = vshrl.u32 %v1451, 7
    %v1453 = vsub.s32 %v1342, %v1452
    %v1454 = vrot.slane %v1197, %v1453
    %v1455 = vsel %vm1347, %v1454, %v1450
    %v1456 = vlaneseq
    %v1457 = vshrl.u32 %v1456, 7
    %v1458 = vsub.s32 %v1349, %v1457
    %v1459 = vrot.slane %v1200, %v1458
    %v1460 = vsel %vm1354, %v1459, %v1455
    %v1461 = vlaneseq
    %v1462 = vshrl.u32 %v1461, 7
    %v1463 = vsub.s32 %v1356, %v1462
    %v1464 = vrot.slane %v1203, %v1463
    %v1465 = vsel %vm1361, %v1464, %v1460
    %v1466 = vlaneseq
    %v1467 = vshrl.u32 %v1466, 7
    %v1468 = vsub.s32 %v1363, %v1467
    %v1469 = vrot.slane %v1206, %v1468
    %v1470 = vsel %vm1368, %v1469, %v1465
    %v1471 = vlaneseq
    %v1472 = vshrl.u32 %v1471, 7
    %v1473 = vsub.s32 %v1370, %v1472
    %v1474 = vrot.slane %v1209, %v1473
    %v1475 = vsel %vm1375, %v1474, %v1470
    %v1476 = vlaneseq
    %v1477 = vshrl.u32 %v1476, 7
    %v1478 = vsub.s32 %v1377, %v1477
    %v1479 = vrot.slane %v1212, %v1478
    %v1480 = vsel %vm1382, %v1479, %v1475
    %v1481 = vlaneseq
    %v1482 = vshrl.u32 %v1481, 7
    %v1483 = vsub.s32 %v1384, %v1482
    %v1484 = vrot.slane %v1215, %v1483
    %v1485 = vsel %vm1389, %v1484, %v1480
    %v1486 = vlaneseq
    %v1487 = vshrl.u32 %v1486, 7
    %v1488 = vsub.s32 %v1391, %v1487
    %v1489 = vrot.slane %v1218, %v1488
    %v1490 = vsel %vm1396, %v1489, %v1485
    %v1491 = vlaneseq
    %v1492 = vshrl.u32 %v1491, 7
    %v1493 = vsub.s32 %v1398, %v1492
    %v1494 = vrot.slane %v1221, %v1493
    %v1495 = vsel %vm1403, %v1494, %v1490
    %v1496 = vlaneseq
    %v1497 = vshrl.u32 %v1496, 7
    %v1498 = vsub.s32 %v1405, %v1497
    %v1499 = vrot.slane %v1224, %v1498
    %v1500 = vsel %vm1410, %v1499, %v1495
    %v1501 = vlaneseq
    %v1502 = vshrl.u32 %v1501, 7
    %v1503 = vsub.s32 %v1412, %v1502
    %v1504 = vrot.slane %v1227, %v1503
    %v1505 = vsel %vm1417, %v1504, %v1500
    %v1506 = vlaneseq
    %v1507 = vshrl.u32 %v1506, 7
    %v1508 = vsub.s32 %v1419, %v1507
    %v1509 = vrot.slane %v1230, %v1508
    %v1510 = vsel %vm1424, %v1509, %v1505
    %v1511 = vlaneseq
    %v1512 = vshrl.u32 %v1511, 7
    %v1513 = vsub.s32 %v1426, %v1512
    %v1514 = vrot.slane %v1233, %v1513
    %v1515 = vsel %vm1431, %v1514, %v1510
    %v1516 = vlaneseq
    %v1517 = vshrl.u32 %v1516, 7
    %v1518 = vsub.s32 %v1433, %v1517
    %v1519 = vrot.slane %v1236, %v1518
    %v1520 = vsel %vm1438, %v1519, %v1515
    %v1521 = vlaneseq
    %v1522 = vshrl.u32 %v1521, 7
    %v1523 = vsub.s32 %v1440, %v1522
    %v1524 = vrot.slane %v1239, %v1523
    %v1525 = vsel %vm1445, %v1524, %v1520
    %v1526 = vlaneseq
    %v1527 = vshrl.u32 %v1526, 7
    %v1528 = vsub.s32 %v1337, %v1527
    %v1529 = vrot.slane %v1242, %v1528
    %v1530 = vlaneseq
    %v1531 = vshrl.u32 %v1530, 7
    %v1532 = vsub.s32 %v1342, %v1531
    %v1533 = vrot.slane %v1245, %v1532
    %v1534 = vsel %vm1347, %v1533, %v1529
    %v1535 = vlaneseq
    %v1536 = vshrl.u32 %v1535, 7
    %v1537 = vsub.s32 %v1349, %v1536
    %v1538 = vrot.slane %v1248, %v1537
    %v1539 = vsel %vm1354, %v1538, %v1534
    %v1540 = vlaneseq
    %v1541 = vshrl.u32 %v1540, 7
    %v1542 = vsub.s32 %v1356, %v1541
    %v1543 = vrot.slane %v1251, %v1542
    %v1544 = vsel %vm1361, %v1543, %v1539
    %v1545 = vlaneseq
    %v1546 = vshrl.u32 %v1545, 7
    %v1547 = vsub.s32 %v1363, %v1546
    %v1548 = vrot.slane %v1254, %v1547
    %v1549 = vsel %vm1368, %v1548, %v1544
    %v1550 = vlaneseq
    %v1551 = vshrl.u32 %v1550, 7
    %v1552 = vsub.s32 %v1370, %v1551
    %v1553 = vrot.slane %v1257, %v1552
    %v1554 = vsel %vm1375, %v1553, %v1549
    %v1555 = vlaneseq
    %v1556 = vshrl.u32 %v1555, 7
    %v1557 = vsub.s32 %v1377, %v1556
    %v1558 = vrot.slane %v1260, %v1557
    %v1559 = vsel %vm1382, %v1558, %v1554
    %v1560 = vlaneseq
    %v1561 = vshrl.u32 %v1560, 7
    %v1562 = vsub.s32 %v1384, %v1561
    %v1563 = vrot.slane %v1263, %v1562
    %v1564 = vsel %vm1389, %v1563, %v1559
    %v1565 = vlaneseq
    %v1566 = vshrl.u32 %v1565, 7
    %v1567 = vsub.s32 %v1391, %v1566
    %v1568 = vrot.slane %v1266, %v1567
    %v1569 = vsel %vm1396, %v1568, %v1564
    %v1570 = vlaneseq
    %v1571 = vshrl.u32 %v1570, 7
    %v1572 = vsub.s32 %v1398, %v1571
    %v1573 = vrot.slane %v1269, %v1572
    %v1574 = vsel %vm1403, %v1573, %v1569
    %v1575 = vlaneseq
    %v1576 = vshrl.u32 %v1575, 7
    %v1577 = vsub.s32 %v1405, %v1576
    %v1578 = vrot.slane %v1272, %v1577
    %v1579 = vsel %vm1410, %v1578, %v1574
    %v1580 = vlaneseq
    %v1581 = vshrl.u32 %v1580, 7
    %v1582 = vsub.s32 %v1412, %v1581
    %v1583 = vrot.slane %v1275, %v1582
    %v1584 = vsel %vm1417, %v1583, %v1579
    %v1585 = vlaneseq
    %v1586 = vshrl.u32 %v1585, 7
    %v1587 = vsub.s32 %v1419, %v1586
    %v1588 = vrot.slane %v1278, %v1587
    %v1589 = vsel %vm1424, %v1588, %v1584
    %v1590 = vlaneseq
    %v1591 = vshrl.u32 %v1590, 7
    %v1592 = vsub.s32 %v1426, %v1591
    %v1593 = vrot.slane %v1281, %v1592
    %v1594 = vsel %vm1431, %v1593, %v1589
    %v1595 = vlaneseq
    %v1596 = vshrl.u32 %v1595, 7
    %v1597 = vsub.s32 %v1433, %v1596
    %v1598 = vrot.slane %v1284, %v1597
    %v1599 = vsel %vm1438, %v1598, %v1594
    %v1600 = vlaneseq
    %v1601 = vshrl.u32 %v1600, 7
    %v1602 = vsub.s32 %v1440, %v1601
    %v1603 = vrot.slane %v1287, %v1602
    %v1604 = vsel %vm1445, %v1603, %v1599
    %v1605 = vlaneseq
    %v1606 = vshrl.u32 %v1605, 7
    %v1607 = vsub.s32 %v1337, %v1606
    %v1608 = vrot.slane %v1290, %v1607
    %v1609 = vlaneseq
    %v1610 = vshrl.u32 %v1609, 7
    %v1611 = vsub.s32 %v1342, %v1610
    %v1612 = vrot.slane %v1293, %v1611
    %v1613 = vsel %vm1347, %v1612, %v1608
    %v1614 = vlaneseq
    %v1615 = vshrl.u32 %v1614, 7
    %v1616 = vsub.s32 %v1349, %v1615
    %v1617 = vrot.slane %v1296, %v1616
    %v1618 = vsel %vm1354, %v1617, %v1613
    %v1619 = vlaneseq
    %v1620 = vshrl.u32 %v1619, 7
    %v1621 = vsub.s32 %v1356, %v1620
    %v1622 = vrot.slane %v1299, %v1621
    %v1623 = vsel %vm1361, %v1622, %v1618
    %v1624 = vlaneseq
    %v1625 = vshrl.u32 %v1624, 7
    %v1626 = vsub.s32 %v1363, %v1625
    %v1627 = vrot.slane %v1302, %v1626
    %v1628 = vsel %vm1368, %v1627, %v1623
    %v1629 = vlaneseq
    %v1630 = vshrl.u32 %v1629, 7
    %v1631 = vsub.s32 %v1370, %v1630
    %v1632 = vrot.slane %v1305, %v1631
    %v1633 = vsel %vm1375, %v1632, %v1628
    %v1634 = vlaneseq
    %v1635 = vshrl.u32 %v1634, 7
    %v1636 = vsub.s32 %v1377, %v1635
    %v1637 = vrot.slane %v1308, %v1636
    %v1638 = vsel %vm1382, %v1637, %v1633
    %v1639 = vlaneseq
    %v1640 = vshrl.u32 %v1639, 7
    %v1641 = vsub.s32 %v1384, %v1640
    %v1642 = vrot.slane %v1311, %v1641
    %v1643 = vsel %vm1389, %v1642, %v1638
    %v1644 = vlaneseq
    %v1645 = vshrl.u32 %v1644, 7
    %v1646 = vsub.s32 %v1391, %v1645
    %v1647 = vrot.slane %v1314, %v1646
    %v1648 = vsel %vm1396, %v1647, %v1643
    %v1649 = vlaneseq
    %v1650 = vshrl.u32 %v1649, 7
    %v1651 = vsub.s32 %v1398, %v1650
    %v1652 = vrot.slane %v1317, %v1651
    %v1653 = vsel %vm1403, %v1652, %v1648
    %v1654 = vlaneseq
    %v1655 = vshrl.u32 %v1654, 7
    %v1656 = vsub.s32 %v1405, %v1655
    %v1657 = vrot.slane %v1320, %v1656
    %v1658 = vsel %vm1410, %v1657, %v1653
    %v1659 = vlaneseq
    %v1660 = vshrl.u32 %v1659, 7
    %v1661 = vsub.s32 %v1412, %v1660
    %v1662 = vrot.slane %v1323, %v1661
    %v1663 = vsel %vm1417, %v1662, %v1658
    %v1664 = vlaneseq
    %v1665 = vshrl.u32 %v1664, 7
    %v1666 = vsub.s32 %v1419, %v1665
    %v1667 = vrot.slane %v1326, %v1666
    %v1668 = vsel %vm1424, %v1667, %v1663
    %v1669 = vlaneseq
    %v1670 = vshrl.u32 %v1669, 7
    %v1671 = vsub.s32 %v1426, %v1670
    %v1672 = vrot.slane %v1329, %v1671
    %v1673 = vsel %vm1431, %v1672, %v1668
    %v1674 = vlaneseq
    %v1675 = vshrl.u32 %v1674, 7
    %v1676 = vsub.s32 %v1433, %v1675
    %v1677 = vrot.slane %v1332, %v1676
    %v1678 = vsel %vm1438, %v1677, %v1673
    %v1679 = vlaneseq
    %v1680 = vshrl.u32 %v1679, 7
    %v1681 = vsub.s32 %v1440, %v1680
    %v1682 = vrot.slane %v1335, %v1681
    %v1683 = vsel %vm1445, %v1682, %v1678
    %vm1684 = vcmask 1041409
    %v1685 = vsel %vm1684, %v1525, %v1446
    %vm1686 = vcmask 1042434
    %v1687 = vsel %vm1686, %v1604, %v1685
    %vm1688 = vcmask 1043459
    %v1689 = vsel %vm1688, %v1683, %v1687
    %1691 = vst [vmem:[#allocation7] sm:$0xf] %v1689
    // Predicated region
    $region22: #{tpu_custom_call.1} parent=1 // pred_check
      _
    $region23: #{tpu_custom_call.1} parent=1 // pred_check_branch
      %1693 = sbr.rel (0) target = $region25
    $region24: #{tpu_custom_call.1} parent=1 // pred_region
      %s1695 = ssub.s32 64, 64
      %1696 = vsyncadd [#allocation4], %s1695
      %s1698 = sshll.u32 [#allocation7], 4
      %s1699 = int_to_ptr.vmem [resolvable:$true] %s1698
      %1701 = dma.vmem_to_hbm [thread:$0]  %s1699, 64, %s3, [#allocation4]
    $region25: #{tpu_custom_call.1} parent=1 // pred_fallthru
      _
    // Predicated region
    $region26: #{tpu_custom_call.1} parent=1 // pred_check
      _
    $region27: #{tpu_custom_call.1} parent=1 // pred_check_branch
      %1703 = sbr.rel (0) target = $region29
    $region28: #{tpu_custom_call.1} parent=1 // pred_region
      %1704 = dma.done [#allocation4], 64
    $region29: #{tpu_custom_call.1} parent=1 // pred_fallthru
      _
    %1705 = vsyncpa [#allocation3], 1
    %1706 = vsyncpa [#allocation6], 1
    %1707 = vsyncpa [#allocation4], 1

</llo_original>
